<compile_context>
chip_gen: v6e
topology: v6e:2x2x1
jax: 0.10.0
libtpu: 0.0.40
codegen_flags: <defaults>
</compile_context>

<pallas_src>
import jax
import jax.numpy as jnp
from jax.experimental import pallas as pl
from jax.experimental.pallas import tpu as pltpu

HIDDEN = 128                 # per-network hidden width (nn.Linear(*, 128))
FUSED_HIDDEN = 2 * HIDDEN    # actor + critic hidden, fused side by side
OUT_PAD = 128                # lane-dense output slab: [mu | value | zero pad]
MAX_TILE_B = 256             # batch tile rows (matches 256-row MXU on v6e/v7x)


def _round_up(x, m):
    return ((x + m - 1) // m) * m


def _fused_kernel(x_ref, w1_ref, b1_ref, w2_ref, b2_ref, w3_ref, b3_ref, out_ref):
    """One batch tile of the fused actor+critic MLP (all f32, MXU-accumulated)."""
    x = x_ref[...]
    h = jnp.tanh(
        jnp.dot(x, w1_ref[...], preferred_element_type=jnp.float32) + b1_ref[...]
    )
    h = jnp.tanh(
        jnp.dot(h, w2_ref[...], preferred_element_type=jnp.float32) + b2_ref[...]
    )
    out_ref[...] = (
        jnp.dot(h, w3_ref[...], preferred_element_type=jnp.float32) + b3_ref[...]
    )


def pack_params(p):
    """Fuse actor/critic weights once (outside the per-call hot path)."""
    action_dim = p["aw3"].shape[1]
    assert action_dim + 1 <= OUT_PAD, "action_dim too large for the 128-lane output slab"

    # Layer 1: concatenate along the output (lane) axis -> (state_dim, 256).
    w1 = jnp.concatenate([p["aw1"], p["cw1"]], axis=1)
    b1 = jnp.concatenate([p["ab1"], p["cb1"]], axis=1)

    # Layer 2: block-diagonal -> (256, 256).
    z = jnp.zeros((HIDDEN, HIDDEN), jnp.float32)
    w2 = jnp.concatenate(
        [jnp.concatenate([p["aw2"], z], axis=1),
         jnp.concatenate([z, p["cw2"]], axis=1)],
        axis=0,
    )
    b2 = jnp.concatenate([p["ab2"], p["cb2"]], axis=1)

    # Layer 3: zero-padded block-diagonal into a 128-lane slab -> (256, 128).
    w3 = jnp.zeros((FUSED_HIDDEN, OUT_PAD), jnp.float32)
    w3 = w3.at[:HIDDEN, :action_dim].set(p["aw3"])
    w3 = w3.at[HIDDEN:, action_dim:action_dim + 1].set(p["cw3"])
    b3 = jnp.zeros((1, OUT_PAD), jnp.float32)
    b3 = b3.at[:, :action_dim].set(p["ab3"])
    b3 = b3.at[:, action_dim:action_dim + 1].set(p["cb3"])

    return dict(w1=w1, b1=b1, w2=w2, b2=b2, w3=w3, b3=b3, log_std=p["log_std"])


@jax.jit
def actor_critic_forward(state, packed):
    """Fused forward for ActorCriticMLP. Returns (mu, value, std)."""
    B, state_dim = state.shape
    action_dim = packed["log_std"].shape[-1]

    # Batch tiling: largest-of {256, B rounded to a sublane multiple}, then pad.
    tile_b = min(MAX_TILE_B, _round_up(B, 8))
    b_pad = _round_up(B, tile_b)
    if b_pad != B:
        state = jnp.pad(state, ((0, b_pad - B), (0, 0)))
    grid = (b_pad // tile_b,)

    # Advisory cost estimate for XLA's scheduler around the custom call.
    flops = 2 * b_pad * (
        state_dim * FUSED_HIDDEN + FUSED_HIDDEN * FUSED_HIDDEN + FUSED_HIDDEN * OUT_PAD
    )
    transcendentals = 2 * b_pad * FUSED_HIDDEN
    bytes_accessed = 4 * (
        b_pad * state_dim + b_pad * OUT_PAD
        + state_dim * FUSED_HIDDEN + FUSED_HIDDEN * FUSED_HIDDEN
        + FUSED_HIDDEN * OUT_PAD + 2 * FUSED_HIDDEN + OUT_PAD
    )

    out = pl.pallas_call(
        _fused_kernel,
        out_shape=jax.ShapeDtypeStruct((b_pad, OUT_PAD), jnp.float32),
        grid=grid,
        in_specs=[
            pl.BlockSpec((tile_b, state_dim), lambda i: (i, 0)),            # state tile
            pl.BlockSpec((state_dim, FUSED_HIDDEN), lambda i: (0, 0)),      # w1 (resident)
            pl.BlockSpec((1, FUSED_HIDDEN), lambda i: (0, 0)),              # b1
            pl.BlockSpec((FUSED_HIDDEN, FUSED_HIDDEN), lambda i: (0, 0)),   # w2
            pl.BlockSpec((1, FUSED_HIDDEN), lambda i: (0, 0)),              # b2
            pl.BlockSpec((FUSED_HIDDEN, OUT_PAD), lambda i: (0, 0)),        # w3
            pl.BlockSpec((1, OUT_PAD), lambda i: (0, 0)),                   # b3
        ],
        out_specs=pl.BlockSpec((tile_b, OUT_PAD), lambda i: (i, 0)),
        compiler_params=pltpu.CompilerParams(
            dimension_semantics=("parallel",),
        ),
        cost_estimate=pl.CostEstimate(
            flops=flops,
            transcendentals=transcendentals,
            bytes_accessed=bytes_accessed,
        ),
    )(
        state,
        packed["w1"], packed["b1"],
        packed["w2"], packed["b2"],
        packed["w3"], packed["b3"],
    )

    mu = out[:B, :action_dim]
    value = out[:B, action_dim:action_dim + 1]
    std = jnp.exp(packed["log_std"])  # (1, action_dim); Normal(mu, std) broadcasts over batch
    return mu, value, std


def init_params(key, state_dim, action_dim):
    """Deterministic init mirroring nn.Linear default (uniform +-1/sqrt(fan_in))."""
    def linear(key, fan_in, fan_out):
        kw, kb = jax.random.split(key)
        bound = 1.0 / jnp.sqrt(jnp.float32(fan_in))
        w = jax.random.uniform(kw, (fan_in, fan_out), jnp.float32, -bound, bound)
        b = jax.random.uniform(kb, (1, fan_out), jnp.float32, -bound, bound)
        return w, b

    keys = jax.random.split(key, 6)
    aw1, ab1 = linear(keys[0], state_dim, HIDDEN)
    aw2, ab2 = linear(keys[1], HIDDEN, HIDDEN)
    aw3, ab3 = linear(keys[2], HIDDEN, action_dim)
    cw1, cb1 = linear(keys[3], state_dim, HIDDEN)
    cw2, cb2 = linear(keys[4], HIDDEN, HIDDEN)
    cw3, cb3 = linear(keys[5], HIDDEN, 1)
    log_std = jnp.zeros((1, action_dim), jnp.float32)  # nn.Parameter(torch.zeros(action_dim))
    return dict(
        aw1=aw1, ab1=ab1, aw2=aw2, ab2=ab2, aw3=aw3, ab3=ab3,
        cw1=cw1, cb1=cb1, cw2=cw2, cb2=cb2, cw3=cw3, cb3=cb3,
        log_std=log_std,
    )


def reference_forward(state, p):
    h = jnp.tanh(state @ p["aw1"] + p["ab1"])
    h = jnp.tanh(h @ p["aw2"] + p["ab2"])
    mu = h @ p["aw3"] + p["ab3"]
    g = jnp.tanh(state @ p["cw1"] + p["cb1"])
    g = jnp.tanh(g @ p["cw2"] + p["cb2"])
    value = g @ p["cw3"] + p["cb3"]
    std = jnp.exp(p["log_std"])
    return mu, value, std


if __name__ == "__main__":
    key = jax.random.PRNGKey(0)
    k_state, k_state2, k_param = jax.random.split(key, 3)

    STATE_DIM, ACTION_DIM = 32, 8
    params = init_params(k_param, STATE_DIM, ACTION_DIM)
    packed = pack_params(params)

    def check(state):
        B = state.shape[0]
        mu, value, std = actor_critic_forward(state, packed)
        jax.block_until_ready((mu, value, std))
        mu_r, value_r, std_r = reference_forward(state, params)
        assert mu.shape == (B, ACTION_DIM)
        assert value.shape == (B, 1)
        assert std.shape == (1, ACTION_DIM)
        assert jnp.allclose(mu, mu_r, atol=1e-5, rtol=1e-5)
        assert jnp.allclose(value, value_r, atol=1e-5, rtol=1e-5)
        assert jnp.allclose(std, std_r, atol=1e-6, rtol=1e-6)

    # Small aligned batch.
    check(jax.random.normal(k_state, (8, STATE_DIM), jnp.float32))
    # Batch not divisible by the sublane multiple (exercises the padding path).
    check(jax.random.normal(k_state2, (20, STATE_DIM), jnp.float32))

    print("KERNEL_OK")
</pallas_src>

<mosaic_0001>
module attributes {stable_mosaic.version = 11 : i64} {
  func.func @_fused_kernel(%arg0: i32, %arg1: memref<8x32xf32, #tpu.memory_space<vmem>>, %arg2: memref<32x256xf32, #tpu.memory_space<vmem>>, %arg3: memref<1x256xf32, #tpu.memory_space<vmem>>, %arg4: memref<256x256xf32, #tpu.memory_space<vmem>>, %arg5: memref<1x256xf32, #tpu.memory_space<vmem>>, %arg6: memref<256x128xf32, #tpu.memory_space<vmem>>, %arg7: memref<1x128xf32, #tpu.memory_space<vmem>>, %arg8: memref<8x128xf32, #tpu.memory_space<vmem>>) attributes {dimension_semantics = [#tpu.dimension_semantics<parallel>], iteration_bounds = array<i64: 1>, scalar_prefetch = 0 : i64, scratch_operands = 0 : i64, tpu.core_type = #tpu.core_type<tc>, window_params = [{transform_indices = @transform_0, window_bounds = array<i64: 8, 32>}, {pipeline_mode = #tpu.pipeline_mode<synchronous>, transform_indices = @transform_1, window_bounds = array<i64: 32, 256>}, {pipeline_mode = #tpu.pipeline_mode<synchronous>, transform_indices = @transform_2, window_bounds = array<i64: 1, 256>}, {pipeline_mode = #tpu.pipeline_mode<synchronous>, transform_indices = @transform_3, window_bounds = array<i64: 256, 256>}, {pipeline_mode = #tpu.pipeline_mode<synchronous>, transform_indices = @transform_4, window_bounds = array<i64: 1, 256>}, {pipeline_mode = #tpu.pipeline_mode<synchronous>, transform_indices = @transform_5, window_bounds = array<i64: 256, 128>}, {pipeline_mode = #tpu.pipeline_mode<synchronous>, transform_indices = @transform_6, window_bounds = array<i64: 1, 128>}, {transform_indices = @transform_7, window_bounds = array<i64: 8, 128>}]} {
    %c0 = arith.constant 0 : index
    %c0_0 = arith.constant 0 : index
    %0 = vector.load %arg1[%c0, %c0_0] : memref<8x32xf32, #tpu.memory_space<vmem>>, vector<8x32xf32>
    %c0_1 = arith.constant 0 : index
    %c0_2 = arith.constant 0 : index
    %1 = vector.load %arg2[%c0_1, %c0_2] : memref<32x256xf32, #tpu.memory_space<vmem>>, vector<32x256xf32>
    %cst = arith.constant dense<0.000000e+00> : vector<8x256xf32>
    %2 = tpu.matmul %0, %1, %cst {dimension_numbers = #tpu.dot_dimension_numbers<[1], [0], [0], [1], [0, 0, 1, 1], [], []>} : vector<8x32xf32>, vector<32x256xf32>, vector<8x256xf32> -> vector<8x256xf32>
    %c0_3 = arith.constant 0 : index
    %c0_4 = arith.constant 0 : index
    %3 = vector.load %arg3[%c0_3, %c0_4] : memref<1x256xf32, #tpu.memory_space<vmem>>, vector<1x256xf32>
    %4 = vector.broadcast %3 : vector<1x256xf32> to vector<8x256xf32>
    %5 = arith.addf %2, %4 : vector<8x256xf32>
    %6 = math.tanh %5 : vector<8x256xf32>
    %c0_5 = arith.constant 0 : index
    %c0_6 = arith.constant 0 : index
    %7 = vector.load %arg4[%c0_5, %c0_6] : memref<256x256xf32, #tpu.memory_space<vmem>>, vector<256x256xf32>
    %cst_7 = arith.constant dense<0.000000e+00> : vector<8x256xf32>
    %8 = tpu.matmul %6, %7, %cst_7 {dimension_numbers = #tpu.dot_dimension_numbers<[1], [0], [0], [1], [0, 0, 1, 1], [], []>} : vector<8x256xf32>, vector<256x256xf32>, vector<8x256xf32> -> vector<8x256xf32>
    %c0_8 = arith.constant 0 : index
    %c0_9 = arith.constant 0 : index
    %9 = vector.load %arg5[%c0_8, %c0_9] : memref<1x256xf32, #tpu.memory_space<vmem>>, vector<1x256xf32>
    %10 = vector.broadcast %9 : vector<1x256xf32> to vector<8x256xf32>
    %11 = arith.addf %8, %10 : vector<8x256xf32>
    %12 = math.tanh %11 : vector<8x256xf32>
    %c0_10 = arith.constant 0 : index
    %c0_11 = arith.constant 0 : index
    %13 = vector.load %arg6[%c0_10, %c0_11] : memref<256x128xf32, #tpu.memory_space<vmem>>, vector<256x128xf32>
    %cst_12 = arith.constant dense<0.000000e+00> : vector<8x128xf32>
    %14 = tpu.matmul %12, %13, %cst_12 {dimension_numbers = #tpu.dot_dimension_numbers<[1], [0], [0], [1], [0, 0, 1, 1], [], []>} : vector<8x256xf32>, vector<256x128xf32>, vector<8x128xf32> -> vector<8x128xf32>
    %c0_13 = arith.constant 0 : index
    %c0_14 = arith.constant 0 : index
    %15 = vector.load %arg7[%c0_13, %c0_14] : memref<1x128xf32, #tpu.memory_space<vmem>>, vector<1x128xf32>
    %16 = vector.broadcast %15 : vector<1x128xf32> to vector<8x128xf32>
    %17 = arith.addf %14, %16 : vector<8x128xf32>
    %c0_15 = arith.constant 0 : index
    %c0_16 = arith.constant 0 : index
    %18 = vector.load %arg8[%c0_15, %c0_16] : memref<8x128xf32, #tpu.memory_space<vmem>>, vector<8x128xf32>
    tpu.vector_store %arg8[%c0_15, %c0_16], %17 {strides = array<i32>} : memref<8x128xf32, #tpu.memory_space<vmem>>, vector<8x128xf32>,
    return
  }
  func.func @transform_0(%arg0: i32) -> (i32, i32) {
    %c0_i32 = arith.constant 0 : i32
    %c0_i32_0 = arith.constant 0 : i32
    return %arg0, %c0_i32 : i32, i32
  }
  func.func @transform_1(%arg0: i32) -> (i32, i32) {
    %c0_i32 = arith.constant 0 : i32
    %c0_i32_0 = arith.constant 0 : i32
    %c0_i32_1 = arith.constant 0 : i32
    return %c0_i32, %c0_i32_0 : i32, i32
  }
  func.func @transform_2(%arg0: i32) -> (i32, i32) {
    %c0_i32 = arith.constant 0 : i32
    %c0_i32_0 = arith.constant 0 : i32
    %c0_i32_1 = arith.constant 0 : i32
    return %c0_i32, %c0_i32_0 : i32, i32
  }
  func.func @transform_3(%arg0: i32) -> (i32, i32) {
    %c0_i32 = arith.constant 0 : i32
    %c0_i32_0 = arith.constant 0 : i32
    %c0_i32_1 = arith.constant 0 : i32
    return %c0_i32, %c0_i32_0 : i32, i32
  }
  func.func @transform_4(%arg0: i32) -> (i32, i32) {
    %c0_i32 = arith.constant 0 : i32
    %c0_i32_0 = arith.constant 0 : i32
    %c0_i32_1 = arith.constant 0 : i32
    return %c0_i32, %c0_i32_0 : i32, i32
  }
  func.func @transform_5(%arg0: i32) -> (i32, i32) {
    %c0_i32 = arith.constant 0 : i32
    %c0_i32_0 = arith.constant 0 : i32
    %c0_i32_1 = arith.constant 0 : i32
    return %c0_i32, %c0_i32_0 : i32, i32
  }
  func.func @transform_6(%arg0: i32) -> (i32, i32) {
    %c0_i32 = arith.constant 0 : i32
    %c0_i32_0 = arith.constant 0 : i32
    %c0_i32_1 = arith.constant 0 : i32
    return %c0_i32, %c0_i32_0 : i32, i32
  }
  func.func @transform_7(%arg0: i32) -> (i32, i32) {
    %c0_i32 = arith.constant 0 : i32
    %c0_i32_0 = arith.constant 0 : i32
    return %arg0, %c0_i32 : i32, i32
  }
}

</mosaic_0001>

<llo_original>
// kernel: actor_critic_forward.1
$region0: #{actor_critic_forward.1}
  #allocation0 [shape = 'u32[]', space=smem, size = 0x4, offset = 0x4, fixed_abs, tag = 'smem constant byte address 0x4 - core index']
  #allocation1 [shape = 'u32[144,128]{1,0:T(1,128)}', space=vmem, size = 0x12000, scoped, tag = 'internal scratch']
  %s0 = inlined_call_operand.hbm [shape: f32[8,32], index: 0, kind: input, shape index: {}]
  %s1 = inlined_call_operand.hbm [shape: f32[32,256], index: 1, kind: input, shape index: {}]
  %s2 = inlined_call_operand.vmem [shape: f32[1,256], index: 2, kind: input, shape index: {}]
  %s3 = inlined_call_operand.hbm [shape: f32[256,256], index: 3, kind: input, shape index: {}]
  %s4 = inlined_call_operand.vmem [shape: f32[1,256], index: 4, kind: input, shape index: {}]
  %s5 = inlined_call_operand.hbm [shape: f32[256,128], index: 5, kind: input, shape index: {}]
  %s6 = inlined_call_operand.vmem [shape: f32[1,128], index: 6, kind: input, shape index: {}]
  %s7 = inlined_call_operand.vmem [shape: f32[8,128], index: 7, kind: output, shape index: {}]
  %s8 = sld [smem:[#allocation0]]
  $region54: #{actor_critic_forward.1} parent=0
    _
  %s10 = ssub.s32 1, %s8
  %s11 = scalar_select 0, %s10, %s8
  $region1: #{actor_critic_forward.1} parent=0
    #allocation2 [shape = 'u8[4096]{0}', space=vmem, size = 0x1000, scoped, tag = 'input window, operand 0, single buffered']
    #allocation3 [shape = 's32[1]{0}', space=sflag, size = 0x4, scoped, tag = 'scoped memory for actor_critic_forward.1']
    #allocation4 [shape = 'u8[32768]{0}', space=vmem, size = 0x8000, scoped, tag = 'input window, operand 1, single buffered']
    #allocation5 [shape = 's32[1]{0}', space=sflag, size = 0x4, scoped, tag = 'scoped memory for actor_critic_forward.1']
    #allocation6 [shape = 'u8[262144]{0}', space=vmem, size = 0x40000, scoped, tag = 'input window, operand 3, single buffered']
    #allocation7 [shape = 'u8[131072]{0}', space=vmem, size = 0x20000, scoped, tag = 'input window, operand 5, single buffered']
    #allocation8 [shape = 's32[1]{0}', space=sflag, size = 0x4, scoped, tag = 'scoped memory for actor_critic_forward.1']
    %12 = vsyncpa [#allocation3], 0
    %13 = vsyncpa [#allocation5], 0
    %14 = vsyncpa [#allocation8], 0
    // Predicated region
    $region2: #{actor_critic_forward.1} parent=1 // pred_check
      _
    $region3: #{actor_critic_forward.1} parent=1 // pred_check_branch
      %16 = sbr.rel (0) target = $region5
    $region4: #{actor_critic_forward.1} parent=1 // pred_region
      %s18 = ssub.s32 128, 128
      %19 = vsyncadd [#allocation3], %s18
      %s21 = sshll.u32 [#allocation2], 4
      %s22 = int_to_ptr.vmem [resolvable:$true] %s21
      %24 = dma.hbm_to_vmem [thread:$0]  %s0, 128, %s22, [#allocation3]
    $region5: #{actor_critic_forward.1} parent=1 // pred_fallthru
      _
    // Predicated region
    $region6: #{actor_critic_forward.1} parent=1 // pred_check
      _
    $region7: #{actor_critic_forward.1} parent=1 // pred_check_branch
      %26 = sbr.rel (0) target = $region9
    $region8: #{actor_critic_forward.1} parent=1 // pred_region
      %s28 = ssub.s32 1024, 1024
      %29 = vsyncadd [#allocation5], %s28
      %s30 = sshll.u32 [#allocation4], 4
      %s31 = int_to_ptr.vmem [resolvable:$true] %s30
      %36 = dma.hbm_to_vmem [thread:$0]  %s1, 1024, %s31, [#allocation5], 256, 256, 16
    $region9: #{actor_critic_forward.1} parent=1 // pred_fallthru
      _
    // Predicated region
    $region10: #{actor_critic_forward.1} parent=1 // pred_check
      _
    $region11: #{actor_critic_forward.1} parent=1 // pred_check_branch
      %38 = sbr.rel (0) target = $region13
    $region12: #{actor_critic_forward.1} parent=1 // pred_region
      _
    $region13: #{actor_critic_forward.1} parent=1 // pred_fallthru
      _
    // Predicated region
    $region14: #{actor_critic_forward.1} parent=1 // pred_check
      _
    $region15: #{actor_critic_forward.1} parent=1 // pred_check_branch
      %40 = sbr.rel (0) target = $region17
    $region16: #{actor_critic_forward.1} parent=1 // pred_region
      %s42 = ssub.s32 8192, 8192
      %43 = vsyncadd [#allocation5], %s42
      %s44 = sshll.u32 [#allocation6], 4
      %s45 = int_to_ptr.vmem [resolvable:$true] %s44
      %50 = dma.hbm_to_vmem [thread:$0]  %s3, 8192, %s45, [#allocation5], 256, 256, 16
    $region17: #{actor_critic_forward.1} parent=1 // pred_fallthru
      _
    // Predicated region
    $region18: #{actor_critic_forward.1} parent=1 // pred_check
      _
    $region19: #{actor_critic_forward.1} parent=1 // pred_check_branch
      %52 = sbr.rel (0) target = $region21
    $region20: #{actor_critic_forward.1} parent=1 // pred_region
      _
    $region21: #{actor_critic_forward.1} parent=1 // pred_fallthru
      _
    // Predicated region
    $region22: #{actor_critic_forward.1} parent=1 // pred_check
      _
    $region23: #{actor_critic_forward.1} parent=1 // pred_check_branch
      %54 = sbr.rel (0) target = $region25
    $region24: #{actor_critic_forward.1} parent=1 // pred_region
      %s56 = ssub.s32 4096, 4096
      %57 = vsyncadd [#allocation8], %s56
      %s58 = sshll.u32 [#allocation7], 4
      %s59 = int_to_ptr.vmem [resolvable:$true] %s58
      %64 = dma.hbm_to_vmem [thread:$0]  %s5, 4096, %s59, [#allocation8], 128, 128, 8
    $region25: #{actor_critic_forward.1} parent=1 // pred_fallthru
      _
    // Predicated region
    $region26: #{actor_critic_forward.1} parent=1 // pred_check
      _
    $region27: #{actor_critic_forward.1} parent=1 // pred_check_branch
      %66 = sbr.rel (0) target = $region29
    $region28: #{actor_critic_forward.1} parent=1 // pred_region
      _
    $region29: #{actor_critic_forward.1} parent=1 // pred_fallthru
      _
    // Predicated region
    $region30: #{actor_critic_forward.1} parent=1 // pred_check
      _
    $region31: #{actor_critic_forward.1} parent=1 // pred_check_branch
      %68 = sbr.rel (0) target = $region33
    $region32: #{actor_critic_forward.1} parent=1 // pred_region
      %69 = dma.done [#allocation3], 128
    $region33: #{actor_critic_forward.1} parent=1 // pred_fallthru
      _
    // Predicated region
    $region34: #{actor_critic_forward.1} parent=1 // pred_check
      _
    $region35: #{actor_critic_forward.1} parent=1 // pred_check_branch
      %71 = sbr.rel (0) target = $region37
    $region36: #{actor_critic_forward.1} parent=1 // pred_region
      %72 = dma.done [#allocation5], 1024
    $region37: #{actor_critic_forward.1} parent=1 // pred_fallthru
      _
    // Predicated region
    $region38: #{actor_critic_forward.1} parent=1 // pred_check
      _
    $region39: #{actor_critic_forward.1} parent=1 // pred_check_branch
      %74 = sbr.rel (0) target = $region41
    $region40: #{actor_critic_forward.1} parent=1 // pred_region
      %75 = dma.done [#allocation5], 8192
    $region41: #{actor_critic_forward.1} parent=1 // pred_fallthru
      _
    // Predicated region
    $region42: #{actor_critic_forward.1} parent=1 // pred_check
      _
    $region43: #{actor_critic_forward.1} parent=1 // pred_check_branch
      %77 = sbr.rel (0) target = $region45
    $region44: #{actor_critic_forward.1} parent=1 // pred_region
      %78 = dma.done [#allocation8], 4096
    $region45: #{actor_critic_forward.1} parent=1 // pred_fallthru
      _
    %v79 = vld [vmem:[#allocation2] sm:$0xff]
    %v80 = vld [vmem:[#allocation4] sm:$0xff]
    %v81 = vld [vmem:[#allocation4 + $0x8] sm:$0xff]
    %v82 = vld [vmem:[#allocation4 + $0x10] sm:$0xff]
    %v83 = vld [vmem:[#allocation4 + $0x18] sm:$0xff]
    %v84 = vld [vmem:[#allocation4 + $0x20] sm:$0xff]
    %v85 = vld [vmem:[#allocation4 + $0x28] sm:$0xff]
    %v86 = vld [vmem:[#allocation4 + $0x30] sm:$0xff]
    %v87 = vld [vmem:[#allocation4 + $0x38] sm:$0xff]
    %v88 = vld [vmem:[%s2] sm:$0x3]
    %v90 = vlaneseq
    %v91 = vshrl.u32 %v90, 7
    %v92 = vsub.s32 0, %v91
    %v93 = vrot.slane %v88, %v92
    %v94 = vlaneseq
    %v95 = vshrl.u32 %v94, 7
    %v96 = vsub.s32 1, %v95
    %v97 = vrot.slane %v88, %v96
    %vm100 = vcmask 261120
    %v102 = vsel %vm100, %v79, 0
    %104 = vmatprep.subr.mxu0 0.0
    %105 = vmatpush1.msra.mxu0 0.0
    %106 = vmatprep.subr.mxu0 0.0
    %107 = vmatpush1.msra.mxu0 0.0
    %108 = vmatprep.subr.mxu0 0.0
    %109 = vmatpush1.msra.mxu0 0.0
    %110 = vmatprep.subr.mxu0 0.0
    %111 = vmatpush1.msra.mxu0 0.0
    %112 = vmatprep.subr.mxu0 0.0
    %113 = vmatpush1.msra.mxu0 0.0
    %114 = vmatprep.subr.mxu0 0.0
    %115 = vmatpush1.msra.mxu0 0.0
    %116 = vmatprep.subr.mxu0 0.0
    %117 = vmatpush1.msra.mxu0 0.0
    %118 = vmatprep.subr.mxu0 0.0
    %119 = vmatpush1.msra.mxu0 0.0
    %120 = vmatprep.subr.mxu0 0.0
    %121 = vmatpush1.msra.mxu0 0.0
    %122 = vmatprep.subr.mxu0 0.0
    %123 = vmatpush1.msra.mxu0 0.0
    %124 = vmatprep.subr.mxu0 0.0
    %125 = vmatpush1.msra.mxu0 0.0
    %126 = vmatprep.subr.mxu0 0.0
    %127 = vmatpush1.msra.mxu0 0.0
    %128 = vmatprep.subr.mxu0 %v87
    %129 = vmatpush1.msra.mxu0 %v86
    %130 = vmatprep.subr.mxu0 %v85
    %131 = vmatpush1.msra.mxu0 %v84
    %132 = vmatprep.subr.mxu0 %v83
    %133 = vmatpush1.msra.mxu0 %v82
    %134 = vmatprep.subr.mxu0 %v81
    %135 = vmatpush1.msra.mxu0 %v80
    %136 = vmatprep.subr.mxu0 0.0
    %137 = vmatpush2.msra.mxu0 0.0
    %138 = vmatprep.subr.mxu0 0.0
    %139 = vmatpush2.msra.mxu0 0.0
    %140 = vmatprep.subr.mxu0 0.0
    %141 = vmatpush2.msra.mxu0 0.0
    %142 = vmatprep.subr.mxu0 0.0
    %143 = vmatpush2.msra.mxu0 0.0
    %144 = vmatprep.subr.mxu0 0.0
    %145 = vmatpush2.msra.mxu0 0.0
    %146 = vmatprep.subr.mxu0 0.0
    %147 = vmatpush2.msra.mxu0 0.0
    %148 = vmatprep.subr.mxu0 0.0
    %149 = vmatpush2.msra.mxu0 0.0
    %150 = vmatprep.subr.mxu0 0.0
    %151 = vmatpush2.msra.mxu0 0.0
    %152 = vmatprep.subr.mxu0 0.0
    %153 = vmatpush2.msra.mxu0 0.0
    %154 = vmatprep.subr.mxu0 0.0
    %155 = vmatpush2.msra.mxu0 0.0
    %156 = vmatprep.subr.mxu0 0.0
    %157 = vmatpush2.msra.mxu0 0.0
    %158 = vmatprep.subr.mxu0 0.0
    %159 = vmatpush2.msra.mxu0 0.0
    %160 = vmatprep.subr.mxu0 0.0
    %161 = vmatpush2.msra.mxu0 0.0
    %162 = vmatprep.subr.mxu0 0.0
    %163 = vmatpush2.msra.mxu0 0.0
    %164 = vmatprep.subr.mxu0 0.0
    %165 = vmatpush2.msra.mxu0 0.0
    %166 = vmatprep.subr.mxu0 0.0
    %167 = vmatpush2.msra.mxu0 0.0
    %168 = vmatprep.mubr.f32.mxu0 0.0
    %169 = vmatmul.mubr.f32.gmra.mxu0 %v102
    %v170 = vpop.f32.mrf.mxu0
    %v171 = vadd.f32 %v93, %v170
    %v172 = vpop.f32.mrf.mxu0
    %v173 = vadd.f32 %v97, %v172
    %174 = vdwg.mxu0
    %v175 = vtanh.pop %v171
    %v176 = vtanh.pop %v173
    %v177 = vld [vmem:[#allocation6] sm:$0xff]
    %v178 = vld [vmem:[#allocation6 + $0x8] sm:$0xff]
    %v179 = vld [vmem:[#allocation6 + $0x10] sm:$0xff]
    %v180 = vld [vmem:[#allocation6 + $0x18] sm:$0xff]
    %v181 = vld [vmem:[#allocation6 + $0x20] sm:$0xff]
    %v182 = vld [vmem:[#allocation6 + $0x28] sm:$0xff]
    %v183 = vld [vmem:[#allocation6 + $0x30] sm:$0xff]
    %v184 = vld [vmem:[#allocation6 + $0x38] sm:$0xff]
    %v185 = vld [vmem:[#allocation6 + $0x40] sm:$0xff]
    %v186 = vld [vmem:[#allocation6 + $0x48] sm:$0xff]
    %v187 = vld [vmem:[#allocation6 + $0x50] sm:$0xff]
    %v188 = vld [vmem:[#allocation6 + $0x58] sm:$0xff]
    %v189 = vld [vmem:[#allocation6 + $0x60] sm:$0xff]
    %v190 = vld [vmem:[#allocation6 + $0x68] sm:$0xff]
    %v191 = vld [vmem:[#allocation6 + $0x70] sm:$0xff]
    %v192 = vld [vmem:[#allocation6 + $0x78] sm:$0xff]
    %v193 = vld [vmem:[#allocation6 + $0x80] sm:$0xff]
    %v194 = vld [vmem:[#allocation6 + $0x88] sm:$0xff]
    %v195 = vld [vmem:[#allocation6 + $0x90] sm:$0xff]
    %v196 = vld [vmem:[#allocation6 + $0x98] sm:$0xff]
    %v197 = vld [vmem:[#allocation6 + $0xa0] sm:$0xff]
    %v198 = vld [vmem:[#allocation6 + $0xa8] sm:$0xff]
    %v199 = vld [vmem:[#allocation6 + $0xb0] sm:$0xff]
    %v200 = vld [vmem:[#allocation6 + $0xb8] sm:$0xff]
    %v201 = vld [vmem:[#allocation6 + $0xc0] sm:$0xff]
    %v202 = vld [vmem:[#allocation6 + $0xc8] sm:$0xff]
    %v203 = vld [vmem:[#allocation6 + $0xd0] sm:$0xff]
    %v204 = vld [vmem:[#allocation6 + $0xd8] sm:$0xff]
    %v205 = vld [vmem:[#allocation6 + $0xe0] sm:$0xff]
    %v206 = vld [vmem:[#allocation6 + $0xe8] sm:$0xff]
    %v207 = vld [vmem:[#allocation6 + $0xf0] sm:$0xff]
    %v208 = vld [vmem:[#allocation6 + $0xf8] sm:$0xff]
    %v209 = vld [vmem:[#allocation6 + $0x100] sm:$0xff]
    %v210 = vld [vmem:[#allocation6 + $0x108] sm:$0xff]
    %v211 = vld [vmem:[#allocation6 + $0x110] sm:$0xff]
    %v212 = vld [vmem:[#allocation6 + $0x118] sm:$0xff]
    %v213 = vld [vmem:[#allocation6 + $0x120] sm:$0xff]
    %v214 = vld [vmem:[#allocation6 + $0x128] sm:$0xff]
    %v215 = vld [vmem:[#allocation6 + $0x130] sm:$0xff]
    %v216 = vld [vmem:[#allocation6 + $0x138] sm:$0xff]
    %v217 = vld [vmem:[#allocation6 + $0x140] sm:$0xff]
    %v218 = vld [vmem:[#allocation6 + $0x148] sm:$0xff]
    %v219 = vld [vmem:[#allocation6 + $0x150] sm:$0xff]
    %v220 = vld [vmem:[#allocation6 + $0x158] sm:$0xff]
    %v221 = vld [vmem:[#allocation6 + $0x160] sm:$0xff]
    %v222 = vld [vmem:[#allocation6 + $0x168] sm:$0xff]
    %v223 = vld [vmem:[#allocation6 + $0x170] sm:$0xff]
    %v224 = vld [vmem:[#allocation6 + $0x178] sm:$0xff]
    %v225 = vld [vmem:[#allocation6 + $0x180] sm:$0xff]
    %v226 = vld [vmem:[#allocation6 + $0x188] sm:$0xff]
    %v227 = vld [vmem:[#allocation6 + $0x190] sm:$0xff]
    %v228 = vld [vmem:[#allocation6 + $0x198] sm:$0xff]
    %v229 = vld [vmem:[#allocation6 + $0x1a0] sm:$0xff]
    %v230 = vld [vmem:[#allocation6 + $0x1a8] sm:$0xff]
    %v231 = vld [vmem:[#allocation6 + $0x1b0] sm:$0xff]
    %v232 = vld [vmem:[#allocation6 + $0x1b8] sm:$0xff]
    %v233 = vld [vmem:[#allocation6 + $0x1c0] sm:$0xff]
    %v234 = vld [vmem:[#allocation6 + $0x1c8] sm:$0xff]
    %v235 = vld [vmem:[#allocation6 + $0x1d0] sm:$0xff]
    %v236 = vld [vmem:[#allocation6 + $0x1d8] sm:$0xff]
    %v237 = vld [vmem:[#allocation6 + $0x1e0] sm:$0xff]
    %v238 = vld [vmem:[#allocation6 + $0x1e8] sm:$0xff]
    %v239 = vld [vmem:[#allocation6 + $0x1f0] sm:$0xff]
    %v240 = vld [vmem:[#allocation6 + $0x1f8] sm:$0xff]
    %v241 = vld [vmem:[%s4] sm:$0x3]
    %v243 = vlaneseq
    %v244 = vshrl.u32 %v243, 7
    %v245 = vsub.s32 0, %v244
    %v246 = vrot.slane %v241, %v245
    %v247 = vlaneseq
    %v248 = vshrl.u32 %v247, 7
    %v249 = vsub.s32 1, %v248
    %v250 = vrot.slane %v241, %v249
    %253 = vmatprep.subr.mxu0 %v208
    %254 = vmatpush1.msra.mxu0 %v207
    %255 = vmatprep.subr.mxu0 %v206
    %256 = vmatpush1.msra.mxu0 %v205
    %257 = vmatprep.subr.mxu0 %v204
    %258 = vmatpush1.msra.mxu0 %v203
    %259 = vmatprep.subr.mxu0 %v202
    %260 = vmatpush1.msra.mxu0 %v201
    %261 = vmatprep.subr.mxu0 %v200
    %262 = vmatpush1.msra.mxu0 %v199
    %263 = vmatprep.subr.mxu0 %v198
    %264 = vmatpush1.msra.mxu0 %v197
    %265 = vmatprep.subr.mxu0 %v196
    %266 = vmatpush1.msra.mxu0 %v195
    %267 = vmatprep.subr.mxu0 %v194
    %268 = vmatpush1.msra.mxu0 %v193
    %269 = vmatprep.subr.mxu0 %v192
    %270 = vmatpush1.msra.mxu0 %v191
    %271 = vmatprep.subr.mxu0 %v190
    %272 = vmatpush1.msra.mxu0 %v189
    %273 = vmatprep.subr.mxu0 %v188
    %274 = vmatpush1.msra.mxu0 %v187
    %275 = vmatprep.subr.mxu0 %v186
    %276 = vmatpush1.msra.mxu0 %v185
    %277 = vmatprep.subr.mxu0 %v184
    %278 = vmatpush1.msra.mxu0 %v183
    %279 = vmatprep.subr.mxu0 %v182
    %280 = vmatpush1.msra.mxu0 %v181
    %281 = vmatprep.subr.mxu0 %v180
    %282 = vmatpush1.msra.mxu0 %v179
    %283 = vmatprep.subr.mxu0 %v178
    %284 = vmatpush1.msra.mxu0 %v177
    %285 = vmatprep.subr.mxu0 %v240
    %286 = vmatpush2.msra.mxu0 %v239
    %287 = vmatprep.subr.mxu0 %v238
    %288 = vmatpush2.msra.mxu0 %v237
    %289 = vmatprep.subr.mxu0 %v236
    %290 = vmatpush2.msra.mxu0 %v235
    %291 = vmatprep.subr.mxu0 %v234
    %292 = vmatpush2.msra.mxu0 %v233
    %293 = vmatprep.subr.mxu0 %v232
    %294 = vmatpush2.msra.mxu0 %v231
    %295 = vmatprep.subr.mxu0 %v230
    %296 = vmatpush2.msra.mxu0 %v229
    %297 = vmatprep.subr.mxu0 %v228
    %298 = vmatpush2.msra.mxu0 %v227
    %299 = vmatprep.subr.mxu0 %v226
    %300 = vmatpush2.msra.mxu0 %v225
    %301 = vmatprep.subr.mxu0 %v224
    %302 = vmatpush2.msra.mxu0 %v223
    %303 = vmatprep.subr.mxu0 %v222
    %304 = vmatpush2.msra.mxu0 %v221
    %305 = vmatprep.subr.mxu0 %v220
    %306 = vmatpush2.msra.mxu0 %v219
    %307 = vmatprep.subr.mxu0 %v218
    %308 = vmatpush2.msra.mxu0 %v217
    %309 = vmatprep.subr.mxu0 %v216
    %310 = vmatpush2.msra.mxu0 %v215
    %311 = vmatprep.subr.mxu0 %v214
    %312 = vmatpush2.msra.mxu0 %v213
    %313 = vmatprep.subr.mxu0 %v212
    %314 = vmatpush2.msra.mxu0 %v211
    %315 = vmatprep.subr.mxu0 %v210
    %316 = vmatpush2.msra.mxu0 %v209
    %317 = vmatprep.mubr.f32.mxu0 %v176
    %318 = vmatmul.mubr.f32.gmra.mxu0 %v175
    %v319 = vpop.f32.mrf.mxu0
    %v320 = vadd.f32 %v246, %v319
    %v321 = vpop.f32.mrf.mxu0
    %v322 = vadd.f32 %v250, %v321
    %323 = vdwg.mxu0
    %v324 = vtanh.pop %v320
    %v325 = vtanh.pop %v322
    %v326 = vld [vmem:[#allocation7] sm:$0xff]
    %v327 = vld [vmem:[#allocation7 + $0x8] sm:$0xff]
    %v328 = vld [vmem:[#allocation7 + $0x10] sm:$0xff]
    %v329 = vld [vmem:[#allocation7 + $0x18] sm:$0xff]
    %v330 = vld [vmem:[#allocation7 + $0x20] sm:$0xff]
    %v331 = vld [vmem:[#allocation7 + $0x28] sm:$0xff]
    %v332 = vld [vmem:[#allocation7 + $0x30] sm:$0xff]
    %v333 = vld [vmem:[#allocation7 + $0x38] sm:$0xff]
    %v334 = vld [vmem:[#allocation7 + $0x40] sm:$0xff]
    %v335 = vld [vmem:[#allocation7 + $0x48] sm:$0xff]
    %v336 = vld [vmem:[#allocation7 + $0x50] sm:$0xff]
    %v337 = vld [vmem:[#allocation7 + $0x58] sm:$0xff]
    %v338 = vld [vmem:[#allocation7 + $0x60] sm:$0xff]
    %v339 = vld [vmem:[#allocation7 + $0x68] sm:$0xff]
    %v340 = vld [vmem:[#allocation7 + $0x70] sm:$0xff]
    %v341 = vld [vmem:[#allocation7 + $0x78] sm:$0xff]
    %v342 = vld [vmem:[#allocation7 + $0x80] sm:$0xff]
    %v343 = vld [vmem:[#allocation7 + $0x88] sm:$0xff]
    %v344 = vld [vmem:[#allocation7 + $0x90] sm:$0xff]
    %v345 = vld [vmem:[#allocation7 + $0x98] sm:$0xff]
    %v346 = vld [vmem:[#allocation7 + $0xa0] sm:$0xff]
    %v347 = vld [vmem:[#allocation7 + $0xa8] sm:$0xff]
    %v348 = vld [vmem:[#allocation7 + $0xb0] sm:$0xff]
    %v349 = vld [vmem:[#allocation7 + $0xb8] sm:$0xff]
    %v350 = vld [vmem:[#allocation7 + $0xc0] sm:$0xff]
    %v351 = vld [vmem:[#allocation7 + $0xc8] sm:$0xff]
    %v352 = vld [vmem:[#allocation7 + $0xd0] sm:$0xff]
    %v353 = vld [vmem:[#allocation7 + $0xd8] sm:$0xff]
    %v354 = vld [vmem:[#allocation7 + $0xe0] sm:$0xff]
    %v355 = vld [vmem:[#allocation7 + $0xe8] sm:$0xff]
    %v356 = vld [vmem:[#allocation7 + $0xf0] sm:$0xff]
    %v357 = vld [vmem:[#allocation7 + $0xf8] sm:$0xff]
    %v358 = vld [vmem:[%s6] sm:$0x1]
    %v360 = vlaneseq
    %v361 = vshrl.u32 %v360, 7
    %v362 = vsub.s32 0, %v361
    %v363 = vrot.slane %v358, %v362
    %365 = vmatprep.subr.mxu0 0.0
    %366 = vmatpush1.msra.mxu0 %v341
    %367 = vmatprep.subr.mxu0 0.0
    %368 = vmatpush1.msra.mxu0 %v340
    %369 = vmatprep.subr.mxu0 0.0
    %370 = vmatpush1.msra.mxu0 %v339
    %371 = vmatprep.subr.mxu0 0.0
    %372 = vmatpush1.msra.mxu0 %v338
    %373 = vmatprep.subr.mxu0 0.0
    %374 = vmatpush1.msra.mxu0 %v337
    %375 = vmatprep.subr.mxu0 0.0
    %376 = vmatpush1.msra.mxu0 %v336
    %377 = vmatprep.subr.mxu0 0.0
    %378 = vmatpush1.msra.mxu0 %v335
    %379 = vmatprep.subr.mxu0 0.0
    %380 = vmatpush1.msra.mxu0 %v334
    %381 = vmatprep.subr.mxu0 0.0
    %382 = vmatpush1.msra.mxu0 %v333
    %383 = vmatprep.subr.mxu0 0.0
    %384 = vmatpush1.msra.mxu0 %v332
    %385 = vmatprep.subr.mxu0 0.0
    %386 = vmatpush1.msra.mxu0 %v331
    %387 = vmatprep.subr.mxu0 0.0
    %388 = vmatpush1.msra.mxu0 %v330
    %389 = vmatprep.subr.mxu0 0.0
    %390 = vmatpush1.msra.mxu0 %v329
    %391 = vmatprep.subr.mxu0 0.0
    %392 = vmatpush1.msra.mxu0 %v328
    %393 = vmatprep.subr.mxu0 0.0
    %394 = vmatpush1.msra.mxu0 %v327
    %395 = vmatprep.subr.mxu0 0.0
    %396 = vmatpush1.msra.mxu0 %v326
    %397 = vmatprep.subr.mxu0 0.0
    %398 = vmatpush2.msra.mxu0 %v357
    %399 = vmatprep.subr.mxu0 0.0
    %400 = vmatpush2.msra.mxu0 %v356
    %401 = vmatprep.subr.mxu0 0.0
    %402 = vmatpush2.msra.mxu0 %v355
    %403 = vmatprep.subr.mxu0 0.0
    %404 = vmatpush2.msra.mxu0 %v354
    %405 = vmatprep.subr.mxu0 0.0
    %406 = vmatpush2.msra.mxu0 %v353
    %407 = vmatprep.subr.mxu0 0.0
    %408 = vmatpush2.msra.mxu0 %v352
    %409 = vmatprep.subr.mxu0 0.0
    %410 = vmatpush2.msra.mxu0 %v351
    %411 = vmatprep.subr.mxu0 0.0
    %412 = vmatpush2.msra.mxu0 %v350
    %413 = vmatprep.subr.mxu0 0.0
    %414 = vmatpush2.msra.mxu0 %v349
    %415 = vmatprep.subr.mxu0 0.0
    %416 = vmatpush2.msra.mxu0 %v348
    %417 = vmatprep.subr.mxu0 0.0
    %418 = vmatpush2.msra.mxu0 %v347
    %419 = vmatprep.subr.mxu0 0.0
    %420 = vmatpush2.msra.mxu0 %v346
    %421 = vmatprep.subr.mxu0 0.0
    %422 = vmatpush2.msra.mxu0 %v345
    %423 = vmatprep.subr.mxu0 0.0
    %424 = vmatpush2.msra.mxu0 %v344
    %425 = vmatprep.subr.mxu0 0.0
    %426 = vmatpush2.msra.mxu0 %v343
    %427 = vmatprep.subr.mxu0 0.0
    %428 = vmatpush2.msra.mxu0 %v342
    %429 = vmatprep.mubr.f32.mxu0 %v325
    %430 = vmatmul.mubr.f32.gmra.mxu0 %v324
    %v431 = vpop.f32.mrf.mxu0
    %v432 = vadd.f32 %v363, %v431
    %v433 = vpop.f32.mrf.mxu0
    %434 = vdwg.mxu0
    %435 = vst [vmem:[%s7] sm:$0xff] %v432
    // Predicated region
    $region46: #{actor_critic_forward.1} parent=1 // pred_check
      _
    $region47: #{actor_critic_forward.1} parent=1 // pred_check_branch
      %437 = sbr.rel (0) target = $region49
    $region48: #{actor_critic_forward.1} parent=1 // pred_region
      _
    $region49: #{actor_critic_forward.1} parent=1 // pred_fallthru
      _
    // Predicated region
    $region50: #{actor_critic_forward.1} parent=1 // pred_check
      _
    $region51: #{actor_critic_forward.1} parent=1 // pred_check_branch
      %439 = sbr.rel (0) target = $region53
    $region52: #{actor_critic_forward.1} parent=1 // pred_region
      _
    $region53: #{actor_critic_forward.1} parent=1 // pred_fallthru
      _
    %440 = vsyncpa [#allocation3], 1
    %441 = vsyncpa [#allocation5], 1
    %442 = vsyncpa [#allocation8], 1

</llo_original>
